<compile_context>
chip_gen: v7x
topology: tpu7x:2x2x1
jax: 0.10.0
libtpu: 0.0.40
codegen_flags: <defaults>
</compile_context>

<pallas_src>
import functools

import jax
import jax.numpy as jnp
from jax.experimental import pallas as pl
from jax.experimental.pallas import tpu as pltpu

LOG_STD_MIN = -5.0
LOG_STD_MAX = 2.0
_SCALE = 0.5 * (LOG_STD_MAX - LOG_STD_MIN)   # 3.5
_SHIFT = LOG_STD_MIN + _SCALE                # -1.5  (== MIN + 0.5*(MAX-MIN))


def sac_policy_kernel(x_ref, w1t_ref, b1t_ref, wht_ref, bht_ref, out_ref, *,
                      action_dim):
    # Hidden layer, transposed: Z^T = relu(W1^T @ X^T + b1^T).
    # Contraction is over n_obs, the last dim of both operands (A @ B^T form),
    # so the batch tile lands on the MXU N dimension / lane axis.
    zt = jax.lax.dot_general(
        w1t_ref[...], x_ref[...],
        dimension_numbers=(((1,), (1,)), ((), ())),
        preferred_element_type=jnp.float32) + b1t_ref[...]
    zt = jnp.maximum(zt, 0.0)                          # [n_hidden, tb]

    # Fused heads: one matmul producing [mean ; log_std] stacked on sublanes.
    ht = jnp.dot(wht_ref[...], zt,
                 preferred_element_type=jnp.float32) + bht_ref[...]  # [2A, tb]

    # Both halves need a tanh: mu = tanh(mean), and the log_std squash starts
    # with tanh(log_std).  Do it once on the whole slab (EUP).
    t = jnp.tanh(ht)

    # std = exp(MIN + 0.5*(MAX-MIN)*(tanh(log_std)+1)) == exp(3.5*t - 1.5).
    # The slab has 2A (<= 8) sublanes, i.e. exactly one vreg-row per 128
    # lanes, so exp on the full slab costs the same number of EUP pushes as
    # exp on only the std rows; the discarded mu-half values are bounded
    # (<= e^2), so this is safe and free.
    std = jnp.exp(_SCALE * t + _SHIFT)

    # Lane-dense single store: first action_dim rows -> mu, rest -> std.
    row = jax.lax.broadcasted_iota(jnp.int32, t.shape, 0)
    out_ref[...] = jnp.where(row < action_dim, t, std)


def prepare_params(w1, b1, wm, bm, ws, bs):
    """Fuse the two heads and transpose all weights ONCE (hoisted out of the
    per-call path).  Returns (w1t, b1t, wht, bht)."""
    w1t = jnp.asarray(w1).T                                    # [n_hidden, n_obs]
    b1t = jnp.asarray(b1).reshape(-1, 1)                       # [n_hidden, 1]
    wht = jnp.concatenate([jnp.asarray(wm), jnp.asarray(ws)], axis=1).T  # [2A, n_hidden]
    bht = jnp.concatenate([jnp.asarray(bm), jnp.asarray(bs)], axis=1).reshape(-1, 1)  # [2A, 1]
    return w1t, b1t, wht, bht


def sac_policy_forward(frame, prepared_params, *, block_b=4096):
    """frame: [B, n_obs]; prepared_params from prepare_params().
    Returns (mu [B, A], std [B, A])."""
    w1t, b1t, wht, bht = prepared_params
    B, n_obs = frame.shape
    n_hidden = w1t.shape[0]
    two_a = wht.shape[0]
    action_dim = two_a // 2

    # Batch tile: a single full-extent block when it fits comfortably,
    # otherwise 128-lane multiples (output lane dim must be 128-aligned when
    # the grid has >1 step).  On v7x one may pass
    # block_b = round_up(cdiv(B, 2), 128) to feed both TensorCores.
    if B <= block_b:
        tb = B
    else:
        tb = max((block_b // 128) * 128, 128)
    grid = (pl.cdiv(B, tb),)

    cost = pl.CostEstimate(
        flops=2 * B * (n_obs * n_hidden + n_hidden * two_a),
        transcendentals=2 * B * two_a,                       # tanh + exp
        bytes_accessed=4 * (B * n_obs + B * two_a
                            + n_obs * n_hidden + n_hidden * two_a
                            + n_hidden + two_a),
    )

    out_t = pl.pallas_call(
        functools.partial(sac_policy_kernel, action_dim=action_dim),
        grid=grid,
        in_specs=[
            pl.BlockSpec((tb, n_obs), lambda i: (i, 0)),          # frame tile
            pl.BlockSpec((n_hidden, n_obs), lambda i: (0, 0)),    # W1^T (resident)
            pl.BlockSpec((n_hidden, 1), lambda i: (0, 0)),        # b1^T (resident)
            pl.BlockSpec((two_a, n_hidden), lambda i: (0, 0)),    # (Wm||Ws)^T
            pl.BlockSpec((two_a, 1), lambda i: (0, 0)),           # (bm||bs)^T
        ],
        out_specs=pl.BlockSpec((two_a, tb), lambda i: (0, i)),    # [2A, B] lane-dense
        out_shape=jax.ShapeDtypeStruct((two_a, B), jnp.float32),
        compiler_params=pltpu.CompilerParams(
            dimension_semantics=("parallel",)),
        cost_estimate=cost,
    )(frame, w1t, b1t, wht, bht)

    mu = out_t[:action_dim, :].T    # [B, A]
    std = out_t[action_dim:, :].T   # [B, A]
    return mu, std


def init_linear_params(key, fan_in, fan_out):
    # Matches PyTorch nn.Linear default init: U(-1/sqrt(fan_in), 1/sqrt(fan_in))
    kw, kb = jax.random.split(key)
    bound = 1.0 / jnp.sqrt(jnp.float32(fan_in))
    w = jax.random.uniform(kw, (fan_in, fan_out), jnp.float32, -bound, bound)
    b = jax.random.uniform(kb, (1, fan_out), jnp.float32, -bound, bound)
    return w, b


def reference_forward(frame, w1, b1, wm, bm, ws, bs):
    z = jax.nn.relu(frame @ w1 + b1)
    mean = z @ wm + bm
    log_std = z @ ws + bs
    log_std = jnp.tanh(log_std)
    log_std = LOG_STD_MIN + 0.5 * (LOG_STD_MAX - LOG_STD_MIN) * (log_std + 1.0)
    return jnp.tanh(mean), jnp.exp(log_std)


if __name__ == "__main__":
    # Small shapes consistent with SACPolicy(n_observations, action_dim, n_hidden)
    batch = 8
    n_observations = 16
    n_hidden = 32
    action_dim = 4

    key = jax.random.PRNGKey(0)
    k_x, k1, k2, k3 = jax.random.split(key, 4)

    frame = jax.random.normal(k_x, (batch, n_observations), jnp.float32)
    w1, b1 = init_linear_params(k1, n_observations, n_hidden)
    wm, bm = init_linear_params(k2, n_hidden, action_dim)
    ws, bs = init_linear_params(k3, n_hidden, action_dim)

    # Head fusion / transposition done once, outside the per-call path.
    params = prepare_params(w1, b1, wm, bm, ws, bs)

    mu, std = sac_policy_forward(frame, params)
    jax.block_until_ready((mu, std))

    # Correctness check against a pure-JAX reference
    mu_ref, std_ref = reference_forward(frame, w1, b1, wm, bm, ws, bs)
    assert mu.shape == (batch, action_dim) and std.shape == (batch, action_dim)
    assert jnp.allclose(mu, mu_ref, atol=1e-5), "mu mismatch"
    assert jnp.allclose(std, std_ref, atol=1e-5), "std mismatch"

    print("KERNEL_OK")
</pallas_src>

<mosaic_0001>
module attributes {stable_mosaic.version = 11 : i64} {
  func.func @sac_policy_kernel(%arg0: i32, %arg1: memref<8x16xf32, #tpu.memory_space<vmem>>, %arg2: memref<32x16xf32, #tpu.memory_space<vmem>>, %arg3: memref<32x1xf32, #tpu.memory_space<vmem>>, %arg4: memref<8x32xf32, #tpu.memory_space<vmem>>, %arg5: memref<8x1xf32, #tpu.memory_space<vmem>>, %arg6: memref<8x8xf32, #tpu.memory_space<vmem>>) attributes {dimension_semantics = [#tpu.dimension_semantics<parallel>], iteration_bounds = array<i64: 1>, scalar_prefetch = 0 : i64, scratch_operands = 0 : i64, tpu.core_type = #tpu.core_type<tc>, window_params = [{transform_indices = @transform_0, window_bounds = array<i64: 8, 16>}, {pipeline_mode = #tpu.pipeline_mode<synchronous>, transform_indices = @transform_1, window_bounds = array<i64: 32, 16>}, {pipeline_mode = #tpu.pipeline_mode<synchronous>, transform_indices = @transform_2, window_bounds = array<i64: 32, 1>}, {pipeline_mode = #tpu.pipeline_mode<synchronous>, transform_indices = @transform_3, window_bounds = array<i64: 8, 32>}, {pipeline_mode = #tpu.pipeline_mode<synchronous>, transform_indices = @transform_4, window_bounds = array<i64: 8, 1>}, {transform_indices = @transform_5, window_bounds = array<i64: 8, 8>}]} {
    %c0 = arith.constant 0 : index
    %c0_0 = arith.constant 0 : index
    %0 = vector.load %arg2[%c0, %c0_0] : memref<32x16xf32, #tpu.memory_space<vmem>>, vector<32x16xf32>
    %c0_1 = arith.constant 0 : index
    %c0_2 = arith.constant 0 : index
    %1 = vector.load %arg1[%c0_1, %c0_2] : memref<8x16xf32, #tpu.memory_space<vmem>>, vector<8x16xf32>
    %cst = arith.constant dense<0.000000e+00> : vector<32x8xf32>
    %2 = tpu.matmul %0, %1, %cst {dimension_numbers = #tpu.dot_dimension_numbers<[1], [1], [0], [0], [0, 0, 1, 0], [], []>} : vector<32x16xf32>, vector<8x16xf32>, vector<32x8xf32> -> vector<32x8xf32>
    %c0_3 = arith.constant 0 : index
    %c0_4 = arith.constant 0 : index
    %3 = vector.load %arg3[%c0_3, %c0_4] : memref<32x1xf32, #tpu.memory_space<vmem>>, vector<32x1xf32>
    %4 = vector.broadcast %3 : vector<32x1xf32> to vector<32x8xf32>
    %5 = arith.addf %2, %4 : vector<32x8xf32>
    %cst_5 = arith.constant 0.000000e+00 : f32
    %6 = vector.broadcast %cst_5 : f32 to vector<32x8xf32>
    %7 = arith.maximumf %5, %6 : vector<32x8xf32>
    %c0_6 = arith.constant 0 : index
    %c0_7 = arith.constant 0 : index
    %8 = vector.load %arg4[%c0_6, %c0_7] : memref<8x32xf32, #tpu.memory_space<vmem>>, vector<8x32xf32>
    %cst_8 = arith.constant dense<0.000000e+00> : vector<8x8xf32>
    %9 = tpu.matmul %8, %7, %cst_8 {dimension_numbers = #tpu.dot_dimension_numbers<[1], [0], [0], [1], [0, 0, 1, 1], [], []>} : vector<8x32xf32>, vector<32x8xf32>, vector<8x8xf32> -> vector<8x8xf32>
    %c0_9 = arith.constant 0 : index
    %c0_10 = arith.constant 0 : index
    %10 = vector.load %arg5[%c0_9, %c0_10] : memref<8x1xf32, #tpu.memory_space<vmem>>, vector<8x1xf32>
    %11 = vector.broadcast %10 : vector<8x1xf32> to vector<8x8xf32>
    %12 = arith.addf %9, %11 : vector<8x8xf32>
    %13 = math.tanh %12 : vector<8x8xf32>
    %cst_11 = arith.constant 3.500000e+00 : f32
    %14 = vector.broadcast %cst_11 : f32 to vector<8x8xf32>
    %15 = arith.mulf %14, %13 : vector<8x8xf32>
    %cst_12 = arith.constant -1.500000e+00 : f32
    %16 = vector.broadcast %cst_12 : f32 to vector<8x8xf32>
    %17 = arith.addf %15, %16 : vector<8x8xf32>
    %18 = math.exp %17 : vector<8x8xf32>
    %19 = tpu.iota {dimensions = array<i32: 0>} : vector<8x8xi32>
    %c4_i32 = arith.constant 4 : i32
    %20 = vector.broadcast %c4_i32 : i32 to vector<8x8xi32>
    %21 = arith.cmpi slt, %19, %20 : vector<8x8xi32>
    %22 = arith.select %21, %13, %18 : vector<8x8xi1>, vector<8x8xf32>
    %c0_13 = arith.constant 0 : index
    %c0_14 = arith.constant 0 : index
    %23 = vector.load %arg6[%c0_13, %c0_14] : memref<8x8xf32, #tpu.memory_space<vmem>>, vector<8x8xf32>
    tpu.vector_store %arg6[%c0_13, %c0_14], %22 {strides = array<i32>} : memref<8x8xf32, #tpu.memory_space<vmem>>, vector<8x8xf32>,
    return
  }
  func.func @transform_0(%arg0: i32) -> (i32, i32) {
    %c0_i32 = arith.constant 0 : i32
    %c0_i32_0 = arith.constant 0 : i32
    return %arg0, %c0_i32 : i32, i32
  }
  func.func @transform_1(%arg0: i32) -> (i32, i32) {
    %c0_i32 = arith.constant 0 : i32
    %c0_i32_0 = arith.constant 0 : i32
    %c0_i32_1 = arith.constant 0 : i32
    return %c0_i32, %c0_i32_0 : i32, i32
  }
  func.func @transform_2(%arg0: i32) -> (i32, i32) {
    %c0_i32 = arith.constant 0 : i32
    %c0_i32_0 = arith.constant 0 : i32
    %c0_i32_1 = arith.constant 0 : i32
    return %c0_i32, %c0_i32_0 : i32, i32
  }
  func.func @transform_3(%arg0: i32) -> (i32, i32) {
    %c0_i32 = arith.constant 0 : i32
    %c0_i32_0 = arith.constant 0 : i32
    %c0_i32_1 = arith.constant 0 : i32
    return %c0_i32, %c0_i32_0 : i32, i32
  }
  func.func @transform_4(%arg0: i32) -> (i32, i32) {
    %c0_i32 = arith.constant 0 : i32
    %c0_i32_0 = arith.constant 0 : i32
    %c0_i32_1 = arith.constant 0 : i32
    return %c0_i32, %c0_i32_0 : i32, i32
  }
  func.func @transform_5(%arg0: i32) -> (i32, i32) {
    %c0_i32 = arith.constant 0 : i32
    %c0_i32_0 = arith.constant 0 : i32
    return %c0_i32, %arg0 : i32, i32
  }
}

</mosaic_0001>

<llo_original>
// kernel: tpu_custom_call.1
$region0: #{tpu_custom_call.1}
  #allocation0 [shape = 'u32[]', space=smem, size = 0x4, offset = 0x4, fixed_abs, tag = 'smem constant byte address 0x4 - core index']
  #allocation1 [shape = 'u32[144,128]{1,0:T(1,128)}', space=vmem, size = 0x12000, scoped, tag = 'internal scratch']
  %s0 = inlined_call_operand.vmem [shape: f32[8,16], index: 0, kind: input, shape index: {}]
  %s1 = inlined_call_operand.vmem [shape: f32[32,16], index: 1, kind: input, shape index: {}]
  %s2 = inlined_call_operand.vmem [shape: f32[32,1], index: 2, kind: input, shape index: {}]
  %s3 = inlined_call_operand.vmem [shape: f32[8,32], index: 3, kind: input, shape index: {}]
  %s4 = inlined_call_operand.vmem [shape: f32[8,1], index: 4, kind: input, shape index: {}]
  %s5 = inlined_call_operand.hbm [shape: f32[8,8], index: 5, kind: output, shape index: {}]
  %s6 = sld [smem:[#allocation0]]
  $region30: #{tpu_custom_call.1} parent=0
    _
  %s8 = ssub.s32 1, %s6
  %s9 = scalar_select 0, %s8, %s6
  $region1: #{tpu_custom_call.1} parent=0
    #allocation2 [shape = 'u8[4096]{0}', space=vmem, size = 0x1000, scoped, tag = 'output window, operand 0, single buffered']
    #allocation3 [shape = 's32[1]{0}', space=sflag, size = 0x4, scoped, tag = 'scoped memory for tpu_custom_call.1']
    %10 = vsyncpa [#allocation3], 0
    // Predicated region
    $region2: #{tpu_custom_call.1} parent=1 // pred_check
      _
    $region3: #{tpu_custom_call.1} parent=1 // pred_check_branch
      %12 = sbr.rel (0) target = $region5
    $region4: #{tpu_custom_call.1} parent=1 // pred_region
      _
    $region5: #{tpu_custom_call.1} parent=1 // pred_fallthru
      _
    // Predicated region
    $region6: #{tpu_custom_call.1} parent=1 // pred_check
      _
    $region7: #{tpu_custom_call.1} parent=1 // pred_check_branch
      %14 = sbr.rel (0) target = $region9
    $region8: #{tpu_custom_call.1} parent=1 // pred_region
      _
    $region9: #{tpu_custom_call.1} parent=1 // pred_fallthru
      _
    // Predicated region
    $region10: #{tpu_custom_call.1} parent=1 // pred_check
      _
    $region11: #{tpu_custom_call.1} parent=1 // pred_check_branch
      %16 = sbr.rel (0) target = $region13
    $region12: #{tpu_custom_call.1} parent=1 // pred_region
      _
    $region13: #{tpu_custom_call.1} parent=1 // pred_fallthru
      _
    // Predicated region
    $region14: #{tpu_custom_call.1} parent=1 // pred_check
      _
    $region15: #{tpu_custom_call.1} parent=1 // pred_check_branch
      %18 = sbr.rel (0) target = $region17
    $region16: #{tpu_custom_call.1} parent=1 // pred_region
      _
    $region17: #{tpu_custom_call.1} parent=1 // pred_fallthru
      _
    // Predicated region
    $region18: #{tpu_custom_call.1} parent=1 // pred_check
      _
    $region19: #{tpu_custom_call.1} parent=1 // pred_check_branch
      %20 = sbr.rel (0) target = $region21
    $region20: #{tpu_custom_call.1} parent=1 // pred_region
      _
    $region21: #{tpu_custom_call.1} parent=1 // pred_fallthru
      _
    %v21 = vld [vmem:[%s1] sm:$0xff]
    %v22 = vld [vmem:[%s1 + $0x8] sm:$0xff]
    %v23 = vld [vmem:[%s1 + $0x10] sm:$0xff]
    %v24 = vld [vmem:[%s1 + $0x18] sm:$0xff]
    %v25 = vld [vmem:[%s0] sm:$0xff]
    %v26 = vld [vmem:[%s2] sm:$0xff]
    %v27 = vld [vmem:[%s2 + $0x8] sm:$0xff]
    %v28 = vld [vmem:[%s2 + $0x10] sm:$0xff]
    %v29 = vld [vmem:[%s2 + $0x18] sm:$0xff]
    %31 = vset.pattern.permute.xlu0 0
    %32 = vperm.xlu0 %31, %v26
    %v33 = vpop.permute.xlu0 %32
    %36 = vset.pattern.permute.xlu0 0
    %37 = vperm.xlu0 %36, %v27
    %v38 = vpop.permute.xlu0 %37
    %41 = vset.pattern.permute.xlu0 0
    %42 = vperm.xlu0 %41, %v28
    %v43 = vpop.permute.xlu0 %42
    %46 = vset.pattern.permute.xlu0 0
    %47 = vperm.xlu0 %46, %v29
    %v48 = vpop.permute.xlu0 %47
    %vm50 = vcmask 130048
    %v52 = vsel %vm50, %v21, 0
    %v55 = vsel %vm50, %v22, 0
    %v58 = vsel %vm50, %v23, 0
    %v61 = vsel %vm50, %v24, 0
    %v64 = vsel %vm50, %v25, 0
    %66 = vmatprep.subr.mxu0 0.0
    %67 = vmatpush1.xpose.msra.mxu0 %v64
    %68 = vmatprep.subr.mxu0 0.0
    %69 = vmatpush1.xpose.msra.mxu0 0.0
    %70 = vmatprep.subr.mxu0 0.0
    %71 = vmatpush1.xpose.msra.mxu0 0.0
    %72 = vmatprep.subr.mxu0 0.0
    %73 = vmatpush1.xpose.msra.mxu0 0.0
    %74 = vmatprep.subr.mxu0 0.0
    %75 = vmatpush1.xpose.msra.mxu0 0.0
    %76 = vmatprep.subr.mxu0 0.0
    %77 = vmatpush1.xpose.msra.mxu0 0.0
    %78 = vmatprep.subr.mxu0 0.0
    %79 = vmatpush1.xpose.msra.mxu0 0.0
    %80 = vmatprep.subr.mxu0 0.0
    %81 = vmatpush1.xpose.msra.mxu0 0.0
    %82 = vmatprep.subr.mxu0 0.0
    %83 = vmatpush1.xpose.msra.mxu0 0.0
    %84 = vmatprep.subr.mxu0 0.0
    %85 = vmatpush1.xpose.msra.mxu0 0.0
    %86 = vmatprep.subr.mxu0 0.0
    %87 = vmatpush1.xpose.msra.mxu0 0.0
    %88 = vmatprep.subr.mxu0 0.0
    %89 = vmatpush1.xpose.msra.mxu0 0.0
    %90 = vmatprep.subr.mxu0 0.0
    %91 = vmatpush1.xpose.msra.mxu0 0.0
    %92 = vmatprep.subr.mxu0 0.0
    %93 = vmatpush1.xpose.msra.mxu0 0.0
    %94 = vmatprep.subr.mxu0 0.0
    %95 = vmatpush1.xpose.msra.mxu0 0.0
    %96 = vmatprep.subr.mxu0 0.0
    %97 = vmatpush1.xpose.msra.mxu0 0.0
    %98 = vmatprep.subr.mxu0 0.0
    %99 = vmatpush1.xpose.msra.mxu0 0.0
    %100 = vmatprep.subr.mxu0 0.0
    %101 = vmatpush1.xpose.msra.mxu0 0.0
    %102 = vmatprep.subr.mxu0 0.0
    %103 = vmatpush1.xpose.msra.mxu0 0.0
    %104 = vmatprep.subr.mxu0 0.0
    %105 = vmatpush1.xpose.msra.mxu0 0.0
    %106 = vmatprep.subr.mxu0 0.0
    %107 = vmatpush1.xpose.msra.mxu0 0.0
    %108 = vmatprep.subr.mxu0 0.0
    %109 = vmatpush1.xpose.msra.mxu0 0.0
    %110 = vmatprep.subr.mxu0 0.0
    %111 = vmatpush1.xpose.msra.mxu0 0.0
    %112 = vmatprep.subr.mxu0 0.0
    %113 = vmatpush1.xpose.msra.mxu0 0.0
    %114 = vmatprep.subr.mxu0 0.0
    %115 = vmatpush1.xpose.msra.mxu0 0.0
    %116 = vmatprep.subr.mxu0 0.0
    %117 = vmatpush1.xpose.msra.mxu0 0.0
    %118 = vmatprep.subr.mxu0 0.0
    %119 = vmatpush1.xpose.msra.mxu0 0.0
    %120 = vmatprep.subr.mxu0 0.0
    %121 = vmatpush1.xpose.msra.mxu0 0.0
    %122 = vmatprep.subr.mxu0 0.0
    %123 = vmatpush1.xpose.msra.mxu0 0.0
    %124 = vmatprep.subr.mxu0 0.0
    %125 = vmatpush1.xpose.msra.mxu0 0.0
    %126 = vmatprep.subr.mxu0 0.0
    %127 = vmatpush1.xpose.msra.mxu0 0.0
    %128 = vmatprep.subr.mxu0 0.0
    %129 = vmatpush1.xpose.msra.mxu0 0.0
    %130 = vmatprep.mubr.f32.mxu0 0.0
    %131 = vmatmul.mubr.f32.gmra.mrb[0].mxu0 %v52
    %v132 = vpop.f32.mrb[0].mxu0
    %v133 = vadd.f32 %v33, %v132
    %v134 = vpop.f32.mrb[0].mxu0
    %135 = vmatprep.mubr.f32.mxu0 0.0
    %136 = vmatmul.mubr.f32.gmra.mrb[0].mxu0 %v55
    %v137 = vpop.f32.mrb[0].mxu0
    %v138 = vadd.f32 %v38, %v137
    %v139 = vpop.f32.mrb[0].mxu0
    %140 = vmatprep.mubr.f32.mxu0 0.0
    %141 = vmatmul.mubr.f32.gmra.mrb[0].mxu0 %v58
    %v142 = vpop.f32.mrb[0].mxu0
    %v143 = vadd.f32 %v43, %v142
    %v144 = vpop.f32.mrb[0].mxu0
    %145 = vmatprep.mubr.f32.mxu0 0.0
    %146 = vmatmul.mubr.f32.gmra.mrb[0].mxu0 %v61
    %v147 = vpop.f32.mrb[0].mxu0
    %v148 = vadd.f32 %v48, %v147
    %v149 = vpop.f32.mrb[0].mxu0
    %150 = vdwg.mxu0
    %v151 = vmax.f32 %v133, 0.0
    %v152 = vmax.f32 %v138, 0.0
    %v153 = vmax.f32 %v143, 0.0
    %v154 = vmax.f32 %v148, 0.0
    %v155 = vld [vmem:[%s3] sm:$0xff]
    %v156 = vld [vmem:[%s4] sm:$0xff]
    %158 = vset.pattern.permute.xlu0 0
    %159 = vperm.xlu0 %158, %v156
    %v160 = vpop.permute.xlu0 %159
    %vm162 = vcmask 261120
    %v164 = vsel %vm162, %v155, 0
    %166 = vmatprep.subr.mxu0 0.0
    %167 = vmatpush1.msra.mxu0 %v151
    %168 = vmatprep.subr.mxu0 0.0
    %169 = vmatpush1.msra.mxu0 %v152
    %170 = vmatprep.subr.mxu0 0.0
    %171 = vmatpush1.msra.mxu0 %v153
    %172 = vmatprep.subr.mxu0 0.0
    %173 = vmatpush1.msra.mxu0 %v154
    %174 = vmatprep.subr.mxu0 0.0
    %175 = vmatpush1.msra.mxu0 0.0
    %176 = vmatprep.subr.mxu0 0.0
    %177 = vmatpush1.msra.mxu0 0.0
    %178 = vmatprep.subr.mxu0 0.0
    %179 = vmatpush1.msra.mxu0 0.0
    %180 = vmatprep.subr.mxu0 0.0
    %181 = vmatpush1.msra.mxu0 0.0
    %182 = vmatprep.subr.mxu0 0.0
    %183 = vmatpush1.msra.mxu0 0.0
    %184 = vmatprep.subr.mxu0 0.0
    %185 = vmatpush1.msra.mxu0 0.0
    %186 = vmatprep.subr.mxu0 0.0
    %187 = vmatpush1.msra.mxu0 0.0
    %188 = vmatprep.subr.mxu0 0.0
    %189 = vmatpush1.msra.mxu0 0.0
    %190 = vmatprep.subr.mxu0 0.0
    %191 = vmatpush1.msra.mxu0 0.0
    %192 = vmatprep.subr.mxu0 0.0
    %193 = vmatpush1.msra.mxu0 0.0
    %194 = vmatprep.subr.mxu0 0.0
    %195 = vmatpush1.msra.mxu0 0.0
    %196 = vmatprep.subr.mxu0 0.0
    %197 = vmatpush1.msra.mxu0 0.0
    %198 = vmatprep.subr.mxu0 0.0
    %199 = vmatpush1.msra.mxu0 0.0
    %200 = vmatprep.subr.mxu0 0.0
    %201 = vmatpush1.msra.mxu0 0.0
    %202 = vmatprep.subr.mxu0 0.0
    %203 = vmatpush1.msra.mxu0 0.0
    %204 = vmatprep.subr.mxu0 0.0
    %205 = vmatpush1.msra.mxu0 0.0
    %206 = vmatprep.subr.mxu0 0.0
    %207 = vmatpush1.msra.mxu0 0.0
    %208 = vmatprep.subr.mxu0 0.0
    %209 = vmatpush1.msra.mxu0 0.0
    %210 = vmatprep.subr.mxu0 0.0
    %211 = vmatpush1.msra.mxu0 0.0
    %212 = vmatprep.subr.mxu0 0.0
    %213 = vmatpush1.msra.mxu0 0.0
    %214 = vmatprep.subr.mxu0 0.0
    %215 = vmatpush1.msra.mxu0 0.0
    %216 = vmatprep.subr.mxu0 0.0
    %217 = vmatpush1.msra.mxu0 0.0
    %218 = vmatprep.subr.mxu0 0.0
    %219 = vmatpush1.msra.mxu0 0.0
    %220 = vmatprep.subr.mxu0 0.0
    %221 = vmatpush1.msra.mxu0 0.0
    %222 = vmatprep.subr.mxu0 0.0
    %223 = vmatpush1.msra.mxu0 0.0
    %224 = vmatprep.subr.mxu0 0.0
    %225 = vmatpush1.msra.mxu0 0.0
    %226 = vmatprep.subr.mxu0 0.0
    %227 = vmatpush1.msra.mxu0 0.0
    %228 = vmatprep.subr.mxu0 0.0
    %229 = vmatpush1.msra.mxu0 0.0
    %230 = vmatprep.mubr.f32.mxu0 0.0
    %231 = vmatmul.mubr.f32.gmra.mrb[0].mxu0 %v164
    %v232 = vpop.f32.mrb[0].mxu0
    %v233 = vadd.f32 %v160, %v232
    %v234 = vpop.f32.mrb[0].mxu0
    %235 = vdwg.mxu0
    %v236 = vtanh.pop %v233
    %v237 = vmul.f32 %v236, 3.5
    %v238 = vadd.f32 %v237, -1.5
    %v239 = vmul.f32 %v238, 1.442695
    %v240 = vpow.pop %v239
    %v241 = vlaneseq
    %v242 = vshrl.u32 %v241, 7
    %vm243 = vcmp.lt.s32.totalorder %v242, 4
    %v244 = vsel %vm243, %v236, %v240
    %vm245 = vcmask 64512
    %246 = vst.msk [vmem:[#allocation2] sm:$0xff] %vm245, %v244
    // Predicated region
    $region22: #{tpu_custom_call.1} parent=1 // pred_check
      _
    $region23: #{tpu_custom_call.1} parent=1 // pred_check_branch
      %248 = sbr.rel (0) target = $region25
    $region24: #{tpu_custom_call.1} parent=1 // pred_region
      %s250 = ssub.s32 128, 128
      %251 = vsyncadd [#allocation3], %s250
      %s253 = sshll.u32 [#allocation2], 4
      %s254 = int_to_ptr.vmem [resolvable:$true] %s253
      %256 = dma.vmem_to_hbm [thread:$0]  %s254, 128, %s5, [#allocation3]
    $region25: #{tpu_custom_call.1} parent=1 // pred_fallthru
      _
    // Predicated region
    $region26: #{tpu_custom_call.1} parent=1 // pred_check
      _
    $region27: #{tpu_custom_call.1} parent=1 // pred_check_branch
      %258 = sbr.rel (0) target = $region29
    $region28: #{tpu_custom_call.1} parent=1 // pred_region
      %259 = dma.done [#allocation3], 128
    $region29: #{tpu_custom_call.1} parent=1 // pred_fallthru
      _
    %260 = vsyncpa [#allocation3], 1

</llo_original>
